<compile_context>
chip_gen: v5e
topology: v5e:2x2
jax: 0.10.0
libtpu: 0.0.40
codegen_flags: <defaults>
</compile_context>

<pallas_src>
import random
from itertools import combinations

import jax
import jax.numpy as jnp
import numpy as np
from jax import lax
from jax.experimental import pallas as pl
from jax.experimental.pallas import tpu as pltpu

_EPS = 1e-8  # F.cosine_similarity default eps


def _round_up(x, m):
    return ((x + m - 1) // m) * m


# ------------------------- kernel A: row normalization -------------------------
def _normalize_kernel(x_ref, o_ref):
    x = x_ref[...].astype(jnp.float32)                       # (tile, D)
    sq = jnp.sum(x * x, axis=-1, keepdims=True)              # (tile, 1)
    inv = lax.rsqrt(jnp.maximum(sq, _EPS * _EPS))            # == 1/max(||x||, eps)
    o_ref[...] = (x * inv).astype(o_ref.dtype)


def _normalize_rows(x_padded, tile, out_dtype):
    n_pad, d_pad = x_padded.shape
    return pl.pallas_call(
        _normalize_kernel,
        out_shape=jax.ShapeDtypeStruct((n_pad, d_pad), out_dtype),
        grid=(n_pad // tile,),
        in_specs=[pl.BlockSpec((tile, d_pad), lambda i: (i, 0))],
        out_specs=pl.BlockSpec((tile, d_pad), lambda i: (i, 0)),
        compiler_params=pltpu.CompilerParams(dimension_semantics=("parallel",)),
    )(x_padded)


# ------------------- kernel B: tiled cosine-distance matrix --------------------
def _cosine_dist_tile_kernel(xr_ref, xc_ref, o_ref):
    # gram[i, j] = cos_sim(x_i, x_j): contract feature axis of both operands (MXU).
    gram = lax.dot_general(xr_ref[...], xc_ref[...], (((1,), (1,)), ((), ())),
                           preferred_element_type=jnp.float32)
    o_ref[...] = 1.0 - gram


def cosine_distance_matrix(embeddings, *, use_bf16_mxu=False):
    """(N, N) cosine-distance matrix, 1 - cos_sim, computed with tiled Pallas kernels."""
    n, d = embeddings.shape
    d_pad = _round_up(d, 128)                 # lane-dense contraction dim
    tile = 256 if n > 128 else 128            # 256 on realistic batches, 128 for tiny
    n_pad = _round_up(n, tile)

    x = embeddings.astype(jnp.float32)
    if (n_pad, d_pad) != (n, d):
        x = jnp.pad(x, ((0, n_pad - n), (0, d_pad - d)))

    op_dtype = jnp.bfloat16 if use_bf16_mxu else jnp.float32
    xn = _normalize_rows(x, tile, op_dtype)   # normalize (and cast) once, not per tile

    dist_pad = pl.pallas_call(
        _cosine_dist_tile_kernel,
        out_shape=jax.ShapeDtypeStruct((n_pad, n_pad), jnp.float32),
        grid=(n_pad // tile, n_pad // tile),
        in_specs=[pl.BlockSpec((tile, d_pad), lambda i, j: (i, 0)),
                  pl.BlockSpec((tile, d_pad), lambda i, j: (j, 0))],
        out_specs=pl.BlockSpec((tile, tile), lambda i, j: (i, j)),
        compiler_params=pltpu.CompilerParams(
            dimension_semantics=("parallel", "parallel")),
    )(xn, xn)
    return dist_pad[:n, :n]


# ------------------- kernel C: triplet loss reduction (VPU) --------------------
def _triplet_reduce_kernel(nv_ref, margin_ref, ap_ref, an_ref, out_ref):
    nv = nv_ref[0]                                            # SMEM int32 scalar
    margin = margin_ref[0]                                    # SMEM f32 scalar
    loss = jnp.maximum(ap_ref[...] - an_ref[...] + margin, 0.0)   # (1, Tp_bucket)
    col = lax.broadcasted_iota(jnp.int32, loss.shape, 1)
    loss = jnp.where(col < nv, loss, 0.0)                     # mask padded triplets
    out_ref[0, 0] = jnp.sum(loss) / nv.astype(jnp.float32)


def _triplet_mean_loss(ap, an, margin, num_valid):
    nv = jnp.array([num_valid], dtype=jnp.int32)
    mg = jnp.array([margin], dtype=jnp.float32)
    out = pl.pallas_call(
        _triplet_reduce_kernel,
        out_shape=jax.ShapeDtypeStruct((1, 1), jnp.float32),
        in_specs=[pl.BlockSpec(memory_space=pltpu.MemorySpace.SMEM),
                  pl.BlockSpec(memory_space=pltpu.MemorySpace.SMEM),
                  pl.BlockSpec(memory_space=pltpu.MemorySpace.VMEM),
                  pl.BlockSpec(memory_space=pltpu.MemorySpace.VMEM)],
        out_specs=pl.BlockSpec(memory_space=pltpu.MemorySpace.SMEM),
    )(nv, mg, ap, an)
    return out[0, 0]


# -------------------------- host-side triplet selection ------------------------
def _select_triplets(dist_mat, labels, margin, sampling_strategy):
    """Faithful port of NegativeTripletSelector.get_triplets / get_one_one_triplets."""
    triplets = ([], [], [])
    for label in np.unique(labels):
        label_mask = labels == label
        label_indices = np.where(label_mask)[0]
        if label_indices.shape[0] < 2:
            continue
        negative_indices = np.where(~label_mask)[0]
        if negative_indices.shape[0] == 0:
            continue
        for anchor_idx, pos_idx in combinations(label_indices, 2):
            ap_dist = dist_mat[anchor_idx, pos_idx]
            an_dists = dist_mat[anchor_idx, negative_indices]
            neg_idx = None
            if sampling_strategy == 'random_negative':
                neg_idx = int(random.choice(list(negative_indices)))
            elif sampling_strategy in ('random_semi_hard', 'fixed_semi_hard'):
                semi_loss = ap_dist + margin - an_dists
                possible = np.where(semi_loss > 0)[0]
                if possible.size != 0:
                    if sampling_strategy == 'fixed_semi_hard':
                        neg_list_idx = int(np.argmax(semi_loss))
                    else:
                        neg_list_idx = int(random.choice(list(possible)))
                    neg_idx = int(negative_indices[neg_list_idx])
            if neg_idx is None:
                # NOTE: reproduces the reference quirk exactly — the hardest-easy
                # fallback returns a local index NOT mapped through negative_indices.
                neg_idx = int(np.argmin(an_dists))
            triplets[0].append(int(anchor_idx))
            triplets[1].append(int(pos_idx))
            triplets[2].append(neg_idx)
    return triplets


# ------------------------------------ wrapper ----------------------------------
def online_triplet_loss(embeddings, labels, margin,
                        sampling_strategy='fixed_semi_hard', use_bf16_mxu=False):
    """Returns (mean triplet loss, num_triplets) like OnlineTripletLoss.forward
    (cosine metric, default/triplet branch).

    use_bf16_mxu=True casts normalized operands to bf16 for 2-4x MXU throughput on
    v6e/v7x at ~1e-3 cosine precision (may flip near-tied semi-hard negatives)."""
    # TODO(synk): 'noise_contrastive' and 'all_semi_hard' branches (python `random`
    # sampling + data-dependent variable-length control flow) are not implemented.
    n = embeddings.shape[0]
    dist = cosine_distance_matrix(embeddings, use_bf16_mxu=use_bf16_mxu)
    # D2H once: the same host copy drives both selection and the ap/an gather,
    # so no (Tp, D) embedding gather/re-upload is needed.
    dist_np = np.asarray(jax.device_get(dist))
    labels_np = np.asarray(jax.device_get(labels))
    trip = _select_triplets(dist_np, labels_np, float(margin), sampling_strategy)
    t = len(trip[0])
    if t == 0:
        return jnp.zeros((), jnp.float32), 0

    a_idx = np.asarray(trip[0], dtype=np.int64)
    p_idx = np.asarray(trip[1], dtype=np.int64)
    n_idx = np.asarray(trip[2], dtype=np.int64)
    ap_d = dist_np[a_idx, p_idx].astype(np.float32)   # 1 - cos_sim(a, p), already computed
    an_d = dist_np[a_idx, n_idx].astype(np.float32)   # 1 - cos_sim(a, n)

    # Bucket the triplet count so kernel shapes (and Mosaic compiles) are stable.
    t_pad = max(128, int(pl.next_power_of_2(t)))
    ap = np.zeros((1, t_pad), np.float32)
    an = np.zeros((1, t_pad), np.float32)
    ap[0, :t] = ap_d
    an[0, :t] = an_d

    loss = _triplet_mean_loss(jnp.asarray(ap), jnp.asarray(an), margin, t)
    return loss, t


# -------------------------------------- main ------------------------------------
if __name__ == "__main__":
    key = jax.random.PRNGKey(0)
    embeddings = jax.random.normal(key, (8, 32), dtype=jnp.float32)
    labels = jnp.array([0, 0, 1, 1, 2, 2, 3, 3], dtype=jnp.int32)
    margin = 0.2

    loss, n_triplets = online_triplet_loss(embeddings, labels, margin,
                                           sampling_strategy='fixed_semi_hard')
    loss = jax.block_until_ready(loss)

    # numpy cross-check (follows the PyTorch forward semantics exactly)
    emb_np = np.asarray(embeddings, dtype=np.float32)
    norms = np.maximum(np.linalg.norm(emb_np, axis=1, keepdims=True), _EPS)
    xn = emb_np / norms
    dist_ref = (1.0 - xn @ xn.T).astype(np.float32)
    trip_ref = _select_triplets(dist_ref, np.asarray(labels), margin, 'fixed_semi_hard')
    a_np, p_np, n_np = (emb_np[np.asarray(ix)] for ix in trip_ref)

    def _cs(x, y):
        return np.sum(x * y, -1) / (np.maximum(np.linalg.norm(x, axis=-1), _EPS)
                                    * np.maximum(np.linalg.norm(y, axis=-1), _EPS))

    ref_loss = np.mean(np.maximum((1 - _cs(a_np, p_np)) - (1 - _cs(a_np, n_np)) + margin, 0.0))
    assert n_triplets == len(trip_ref[0]), (n_triplets, len(trip_ref[0]))
    assert abs(float(loss) - float(ref_loss)) < 1e-3, (float(loss), float(ref_loss))

    # exercise the opt-in bf16-MXU fast path (small precision delta expected)
    loss_bf16, nt_bf16 = online_triplet_loss(embeddings, labels, margin,
                                             sampling_strategy='fixed_semi_hard',
                                             use_bf16_mxu=True)
    loss_bf16 = jax.block_until_ready(loss_bf16)
    assert nt_bf16 == n_triplets
    assert np.isfinite(float(loss_bf16))

    print("KERNEL_OK")
</pallas_src>

<mosaic_0001>
module attributes {stable_mosaic.version = 11 : i64} {
  func.func @_normalize_kernel(%arg0: i32, %arg1: memref<128x128xf32, #tpu.memory_space<vmem>>, %arg2: memref<128x128xf32, #tpu.memory_space<vmem>>) attributes {dimension_semantics = [#tpu.dimension_semantics<parallel>], iteration_bounds = array<i64: 1>, scalar_prefetch = 0 : i64, scratch_operands = 0 : i64, tpu.core_type = #tpu.core_type<tc>, window_params = [{transform_indices = @transform_0, window_bounds = array<i64: 128, 128>}, {transform_indices = @transform_1, window_bounds = array<i64: 128, 128>}]} {
    %c0 = arith.constant 0 : index
    %c0_0 = arith.constant 0 : index
    %0 = vector.load %arg1[%c0, %c0_0] : memref<128x128xf32, #tpu.memory_space<vmem>>, vector<128x128xf32>
    %1 = arith.mulf %0, %0 : vector<128x128xf32>
    %cst = arith.constant dense<0.000000e+00> : vector<128xf32>
    %2 = vector.multi_reduction <add>, %1, %cst [1] : vector<128x128xf32> to vector<128xf32>
    %3 = vector.shape_cast %2 : vector<128xf32> to vector<128x1xf32>
    %cst_1 = arith.constant 1.000000e-16 : f32
    %4 = vector.broadcast %cst_1 : f32 to vector<128x1xf32>
    %5 = arith.maximumf %3, %4 : vector<128x1xf32>
    %6 = math.rsqrt %5 : vector<128x1xf32>
    %7 = vector.broadcast %6 : vector<128x1xf32> to vector<128x128xf32>
    %8 = arith.mulf %0, %7 : vector<128x128xf32>
    %c0_2 = arith.constant 0 : index
    %c0_3 = arith.constant 0 : index
    %9 = vector.load %arg2[%c0_2, %c0_3] : memref<128x128xf32, #tpu.memory_space<vmem>>, vector<128x128xf32>
    tpu.vector_store %arg2[%c0_2, %c0_3], %8 {strides = array<i32>} : memref<128x128xf32, #tpu.memory_space<vmem>>, vector<128x128xf32>,
    return
  }
  func.func @transform_0(%arg0: i32) -> (i32, i32) {
    %c0_i32 = arith.constant 0 : i32
    %c0_i32_0 = arith.constant 0 : i32
    return %arg0, %c0_i32 : i32, i32
  }
  func.func @transform_1(%arg0: i32) -> (i32, i32) {
    %c0_i32 = arith.constant 0 : i32
    %c0_i32_0 = arith.constant 0 : i32
    return %arg0, %c0_i32 : i32, i32
  }
}

</mosaic_0001>

<llo_original>
// kernel: tpu_custom_call.1
$region0: #{tpu_custom_call.1}
  #allocation0 [shape = 'u32[]', space=smem, size = 0x4, offset = 0x4, fixed_abs, tag = 'smem constant byte address 0x4 - core index']
  #allocation1 [shape = 'u32[72,128]{1,0:T(1,128)}', space=vmem, size = 0x9000, scoped, tag = 'internal scratch']
  %s0 = inlined_call_operand.hbm [shape: f32[128,128], index: 0, kind: input, shape index: {}]
  %s1 = inlined_call_operand.hbm [shape: f32[128,128], index: 1, kind: output, shape index: {}]
  %s2 = sld [smem:[#allocation0]]
  $region18: #{tpu_custom_call.1} parent=0
    _
  %s4 = ssub.s32 1, %s2
  %s5 = scalar_select 0, %s4, %s2
  $region1: #{tpu_custom_call.1} parent=0
    #allocation2 [shape = 'u8[65536]{0}', space=vmem, size = 0x10000, scoped, tag = 'input window, operand 0, single buffered']
    #allocation3 [shape = 's32[1]{0}', space=sflag, size = 0x4, scoped, tag = 'scoped memory for tpu_custom_call.1']
    #allocation4 [shape = 's32[1]{0}', space=sflag, size = 0x4, scoped, tag = 'scoped memory for tpu_custom_call.1']
    #allocation5 [shape = 'u8[65536]{0}', space=vmem, size = 0x10000, scoped, tag = 'output window, operand 0, single buffered']
    %6 = vsyncpa [#allocation3], 0
    %7 = vsyncpa [#allocation4], 0
    // Predicated region
    $region2: #{tpu_custom_call.1} parent=1 // pred_check
      _
    $region3: #{tpu_custom_call.1} parent=1 // pred_check_branch
      %9 = sbr.rel (0) target = $region5
    $region4: #{tpu_custom_call.1} parent=1 // pred_region
      %11 = vsyncadd [#allocation3], 0
      %s12 = sshll.u32 %s0, 4
      %s13 = int_to_ptr.hbm [resolvable:$true] %s12
      %s14 = sshll.u32 [#allocation2], 4
      %s15 = int_to_ptr.vmem [resolvable:$true] %s14
      %20 = dma.hbm_to_vmem [thread:$0]  %s13, 2048, %s15, [#allocation3], 128, 128, 8
    $region5: #{tpu_custom_call.1} parent=1 // pred_fallthru
      _
    // Predicated region
    $region6: #{tpu_custom_call.1} parent=1 // pred_check
      _
    $region7: #{tpu_custom_call.1} parent=1 // pred_check_branch
      %22 = sbr.rel (0) target = $region9
    $region8: #{tpu_custom_call.1} parent=1 // pred_region
      %24 = dma.done [#allocation3], 2048
    $region9: #{tpu_custom_call.1} parent=1 // pred_fallthru
      _
    %v25 = vld [vmem:[#allocation2] sm:$0xff]
    %v26 = vld [vmem:[#allocation2 + $0x8] sm:$0xff]
    %v27 = vld [vmem:[#allocation2 + $0x10] sm:$0xff]
    %v28 = vld [vmem:[#allocation2 + $0x18] sm:$0xff]
    %v29 = vld [vmem:[#allocation2 + $0x20] sm:$0xff]
    %v30 = vld [vmem:[#allocation2 + $0x28] sm:$0xff]
    %v31 = vld [vmem:[#allocation2 + $0x30] sm:$0xff]
    %v32 = vld [vmem:[#allocation2 + $0x38] sm:$0xff]
    %v33 = vld [vmem:[#allocation2 + $0x40] sm:$0xff]
    %v34 = vld [vmem:[#allocation2 + $0x48] sm:$0xff]
    %v35 = vld [vmem:[#allocation2 + $0x50] sm:$0xff]
    %v36 = vld [vmem:[#allocation2 + $0x58] sm:$0xff]
    %v37 = vld [vmem:[#allocation2 + $0x60] sm:$0xff]
    %v38 = vld [vmem:[#allocation2 + $0x68] sm:$0xff]
    %v39 = vld [vmem:[#allocation2 + $0x70] sm:$0xff]
    %v40 = vld [vmem:[#allocation2 + $0x78] sm:$0xff]
    %v41 = vmul.f32 %v25, %v25
    %v42 = vmul.f32 %v26, %v26
    %v43 = vmul.f32 %v27, %v27
    %v44 = vmul.f32 %v28, %v28
    %v45 = vmul.f32 %v29, %v29
    %v46 = vmul.f32 %v30, %v30
    %v47 = vmul.f32 %v31, %v31
    %v48 = vmul.f32 %v32, %v32
    %v49 = vmul.f32 %v33, %v33
    %v50 = vmul.f32 %v34, %v34
    %v51 = vmul.f32 %v35, %v35
    %v52 = vmul.f32 %v36, %v36
    %v53 = vmul.f32 %v37, %v37
    %v54 = vmul.f32 %v38, %v38
    %v55 = vmul.f32 %v39, %v39
    %v56 = vmul.f32 %v40, %v40
    %57 = vadd.xlane.f32.xlu0 %v41
    %v58 = vpop.xlane.xlu0 %57
    %59 = vadd.xlane.f32.xlu0 %v42
    %v60 = vpop.xlane.xlu0 %59
    %61 = vadd.xlane.f32.xlu0 %v43
    %v62 = vpop.xlane.xlu0 %61
    %63 = vadd.xlane.f32.xlu0 %v44
    %v64 = vpop.xlane.xlu0 %63
    %65 = vadd.xlane.f32.xlu0 %v45
    %v66 = vpop.xlane.xlu0 %65
    %67 = vadd.xlane.f32.xlu0 %v46
    %v68 = vpop.xlane.xlu0 %67
    %69 = vadd.xlane.f32.xlu0 %v47
    %v70 = vpop.xlane.xlu0 %69
    %71 = vadd.xlane.f32.xlu0 %v48
    %v72 = vpop.xlane.xlu0 %71
    %73 = vadd.xlane.f32.xlu0 %v49
    %v74 = vpop.xlane.xlu0 %73
    %75 = vadd.xlane.f32.xlu0 %v50
    %v76 = vpop.xlane.xlu0 %75
    %77 = vadd.xlane.f32.xlu0 %v51
    %v78 = vpop.xlane.xlu0 %77
    %79 = vadd.xlane.f32.xlu0 %v52
    %v80 = vpop.xlane.xlu0 %79
    %81 = vadd.xlane.f32.xlu0 %v53
    %v82 = vpop.xlane.xlu0 %81
    %83 = vadd.xlane.f32.xlu0 %v54
    %v84 = vpop.xlane.xlu0 %83
    %85 = vadd.xlane.f32.xlu0 %v55
    %v86 = vpop.xlane.xlu0 %85
    %87 = vadd.xlane.f32.xlu0 %v56
    %v88 = vpop.xlane.xlu0 %87
    %v89 = vmax.f32 %v58, 1e-16
    %v90 = vmax.f32 %v60, 1e-16
    %v91 = vmax.f32 %v62, 1e-16
    %v92 = vmax.f32 %v64, 1e-16
    %v93 = vmax.f32 %v66, 1e-16
    %v94 = vmax.f32 %v68, 1e-16
    %v95 = vmax.f32 %v70, 1e-16
    %v96 = vmax.f32 %v72, 1e-16
    %v97 = vmax.f32 %v74, 1e-16
    %v98 = vmax.f32 %v76, 1e-16
    %v99 = vmax.f32 %v78, 1e-16
    %v100 = vmax.f32 %v80, 1e-16
    %v101 = vmax.f32 %v82, 1e-16
    %v102 = vmax.f32 %v84, 1e-16
    %v103 = vmax.f32 %v86, 1e-16
    %v104 = vmax.f32 %v88, 1e-16
    %v105 = vrsqrt.pop %v89
    %v106 = vmul.f32 %v105, %v89
    %v107 = vmul.f32 %v106, %v105
    %v108 = vmul.f32 0.5, %v107
    %v109 = vsub.f32 1.5, %v108
    %v110 = vmul.f32 %v105, %v109
    %vm111 = vweird.f32 %v89
    %vm112 = vweird.f32 %v105
    %vm113 = vmor %vm111, %vm112
    %v114 = vsel %vm113, %v105, %v110
    %v115 = vrsqrt.pop %v90
    %v116 = vmul.f32 %v115, %v90
    %v117 = vmul.f32 %v116, %v115
    %v118 = vmul.f32 0.5, %v117
    %v119 = vsub.f32 1.5, %v118
    %v120 = vmul.f32 %v115, %v119
    %vm121 = vweird.f32 %v90
    %vm122 = vweird.f32 %v115
    %vm123 = vmor %vm121, %vm122
    %v124 = vsel %vm123, %v115, %v120
    %v125 = vrsqrt.pop %v91
    %v126 = vmul.f32 %v125, %v91
    %v127 = vmul.f32 %v126, %v125
    %v128 = vmul.f32 0.5, %v127
    %v129 = vsub.f32 1.5, %v128
    %v130 = vmul.f32 %v125, %v129
    %vm131 = vweird.f32 %v91
    %vm132 = vweird.f32 %v125
    %vm133 = vmor %vm131, %vm132
    %v134 = vsel %vm133, %v125, %v130
    %v135 = vrsqrt.pop %v92
    %v136 = vmul.f32 %v135, %v92
    %v137 = vmul.f32 %v136, %v135
    %v138 = vmul.f32 0.5, %v137
    %v139 = vsub.f32 1.5, %v138
    %v140 = vmul.f32 %v135, %v139
    %vm141 = vweird.f32 %v92
    %vm142 = vweird.f32 %v135
    %vm143 = vmor %vm141, %vm142
    %v144 = vsel %vm143, %v135, %v140
    %v145 = vrsqrt.pop %v93
    %v146 = vmul.f32 %v145, %v93
    %v147 = vmul.f32 %v146, %v145
    %v148 = vmul.f32 0.5, %v147
    %v149 = vsub.f32 1.5, %v148
    %v150 = vmul.f32 %v145, %v149
    %vm151 = vweird.f32 %v93
    %vm152 = vweird.f32 %v145
    %vm153 = vmor %vm151, %vm152
    %v154 = vsel %vm153, %v145, %v150
    %v155 = vrsqrt.pop %v94
    %v156 = vmul.f32 %v155, %v94
    %v157 = vmul.f32 %v156, %v155
    %v158 = vmul.f32 0.5, %v157
    %v159 = vsub.f32 1.5, %v158
    %v160 = vmul.f32 %v155, %v159
    %vm161 = vweird.f32 %v94
    %vm162 = vweird.f32 %v155
    %vm163 = vmor %vm161, %vm162
    %v164 = vsel %vm163, %v155, %v160
    %v165 = vrsqrt.pop %v95
    %v166 = vmul.f32 %v165, %v95
    %v167 = vmul.f32 %v166, %v165
    %v168 = vmul.f32 0.5, %v167
    %v169 = vsub.f32 1.5, %v168
    %v170 = vmul.f32 %v165, %v169
    %vm171 = vweird.f32 %v95
    %vm172 = vweird.f32 %v165
    %vm173 = vmor %vm171, %vm172
    %v174 = vsel %vm173, %v165, %v170
    %v175 = vrsqrt.pop %v96
    %v176 = vmul.f32 %v175, %v96
    %v177 = vmul.f32 %v176, %v175
    %v178 = vmul.f32 0.5, %v177
    %v179 = vsub.f32 1.5, %v178
    %v180 = vmul.f32 %v175, %v179
    %vm181 = vweird.f32 %v96
    %vm182 = vweird.f32 %v175
    %vm183 = vmor %vm181, %vm182
    %v184 = vsel %vm183, %v175, %v180
    %v185 = vrsqrt.pop %v97
    %v186 = vmul.f32 %v185, %v97
    %v187 = vmul.f32 %v186, %v185
    %v188 = vmul.f32 0.5, %v187
    %v189 = vsub.f32 1.5, %v188
    %v190 = vmul.f32 %v185, %v189
    %vm191 = vweird.f32 %v97
    %vm192 = vweird.f32 %v185
    %vm193 = vmor %vm191, %vm192
    %v194 = vsel %vm193, %v185, %v190
    %v195 = vrsqrt.pop %v98
    %v196 = vmul.f32 %v195, %v98
    %v197 = vmul.f32 %v196, %v195
    %v198 = vmul.f32 0.5, %v197
    %v199 = vsub.f32 1.5, %v198
    %v200 = vmul.f32 %v195, %v199
    %vm201 = vweird.f32 %v98
    %vm202 = vweird.f32 %v195
    %vm203 = vmor %vm201, %vm202
    %v204 = vsel %vm203, %v195, %v200
    %v205 = vrsqrt.pop %v99
    %v206 = vmul.f32 %v205, %v99
    %v207 = vmul.f32 %v206, %v205
    %v208 = vmul.f32 0.5, %v207
    %v209 = vsub.f32 1.5, %v208
    %v210 = vmul.f32 %v205, %v209
    %vm211 = vweird.f32 %v99
    %vm212 = vweird.f32 %v205
    %vm213 = vmor %vm211, %vm212
    %v214 = vsel %vm213, %v205, %v210
    %v215 = vrsqrt.pop %v100
    %v216 = vmul.f32 %v215, %v100
    %v217 = vmul.f32 %v216, %v215
    %v218 = vmul.f32 0.5, %v217
    %v219 = vsub.f32 1.5, %v218
    %v220 = vmul.f32 %v215, %v219
    %vm221 = vweird.f32 %v100
    %vm222 = vweird.f32 %v215
    %vm223 = vmor %vm221, %vm222
    %v224 = vsel %vm223, %v215, %v220
    %v225 = vrsqrt.pop %v101
    %v226 = vmul.f32 %v225, %v101
    %v227 = vmul.f32 %v226, %v225
    %v228 = vmul.f32 0.5, %v227
    %v229 = vsub.f32 1.5, %v228
    %v230 = vmul.f32 %v225, %v229
    %vm231 = vweird.f32 %v101
    %vm232 = vweird.f32 %v225
    %vm233 = vmor %vm231, %vm232
    %v234 = vsel %vm233, %v225, %v230
    %v235 = vrsqrt.pop %v102
    %v236 = vmul.f32 %v235, %v102
    %v237 = vmul.f32 %v236, %v235
    %v238 = vmul.f32 0.5, %v237
    %v239 = vsub.f32 1.5, %v238
    %v240 = vmul.f32 %v235, %v239
    %vm241 = vweird.f32 %v102
    %vm242 = vweird.f32 %v235
    %vm243 = vmor %vm241, %vm242
    %v244 = vsel %vm243, %v235, %v240
    %v245 = vrsqrt.pop %v103
    %v246 = vmul.f32 %v245, %v103
    %v247 = vmul.f32 %v246, %v245
    %v248 = vmul.f32 0.5, %v247
    %v249 = vsub.f32 1.5, %v248
    %v250 = vmul.f32 %v245, %v249
    %vm251 = vweird.f32 %v103
    %vm252 = vweird.f32 %v245
    %vm253 = vmor %vm251, %vm252
    %v254 = vsel %vm253, %v245, %v250
    %v255 = vrsqrt.pop %v104
    %v256 = vmul.f32 %v255, %v104
    %v257 = vmul.f32 %v256, %v255
    %v258 = vmul.f32 0.5, %v257
    %v259 = vsub.f32 1.5, %v258
    %v260 = vmul.f32 %v255, %v259
    %vm261 = vweird.f32 %v104
    %vm262 = vweird.f32 %v255
    %vm263 = vmor %vm261, %vm262
    %v264 = vsel %vm263, %v255, %v260
    %v265 = vmul.f32 %v25, %v114
    %v266 = vmul.f32 %v26, %v124
    %v267 = vmul.f32 %v27, %v134
    %v268 = vmul.f32 %v28, %v144
    %v269 = vmul.f32 %v29, %v154
    %v270 = vmul.f32 %v30, %v164
    %v271 = vmul.f32 %v31, %v174
    %v272 = vmul.f32 %v32, %v184
    %v273 = vmul.f32 %v33, %v194
    %v274 = vmul.f32 %v34, %v204
    %v275 = vmul.f32 %v35, %v214
    %v276 = vmul.f32 %v36, %v224
    %v277 = vmul.f32 %v37, %v234
    %v278 = vmul.f32 %v38, %v244
    %v279 = vmul.f32 %v39, %v254
    %v280 = vmul.f32 %v40, %v264
    %281 = vst [vmem:[#allocation5] sm:$0xff] %v265
    %282 = vst [vmem:[#allocation5 + $0x8] sm:$0xff] %v266
    %283 = vst [vmem:[#allocation5 + $0x10] sm:$0xff] %v267
    %284 = vst [vmem:[#allocation5 + $0x18] sm:$0xff] %v268
    %285 = vst [vmem:[#allocation5 + $0x20] sm:$0xff] %v269
    %286 = vst [vmem:[#allocation5 + $0x28] sm:$0xff] %v270
    %287 = vst [vmem:[#allocation5 + $0x30] sm:$0xff] %v271
    %288 = vst [vmem:[#allocation5 + $0x38] sm:$0xff] %v272
    %289 = vst [vmem:[#allocation5 + $0x40] sm:$0xff] %v273
    %290 = vst [vmem:[#allocation5 + $0x48] sm:$0xff] %v274
    %291 = vst [vmem:[#allocation5 + $0x50] sm:$0xff] %v275
    %292 = vst [vmem:[#allocation5 + $0x58] sm:$0xff] %v276
    %293 = vst [vmem:[#allocation5 + $0x60] sm:$0xff] %v277
    %294 = vst [vmem:[#allocation5 + $0x68] sm:$0xff] %v278
    %295 = vst [vmem:[#allocation5 + $0x70] sm:$0xff] %v279
    %296 = vst [vmem:[#allocation5 + $0x78] sm:$0xff] %v280
    // Predicated region
    $region10: #{tpu_custom_call.1} parent=1 // pred_check
      _
    $region11: #{tpu_custom_call.1} parent=1 // pred_check_branch
      %298 = sbr.rel (0) target = $region13
    $region12: #{tpu_custom_call.1} parent=1 // pred_region
      %300 = vsyncadd [#allocation4], 0
      %s301 = sshll.u32 [#allocation5], 4
      %s302 = int_to_ptr.vmem [resolvable:$true] %s301
      %s303 = sshll.u32 %s1, 4
      %s304 = int_to_ptr.hbm [resolvable:$true] %s303
      %309 = dma.vmem_to_hbm [thread:$0]  %s302, 2048, %s304, [#allocation4], 128, 128, 8
    $region13: #{tpu_custom_call.1} parent=1 // pred_fallthru
      _
    // Predicated region
    $region14: #{tpu_custom_call.1} parent=1 // pred_check
      _
    $region15: #{tpu_custom_call.1} parent=1 // pred_check_branch
      %311 = sbr.rel (0) target = $region17
    $region16: #{tpu_custom_call.1} parent=1 // pred_region
      %313 = dma.done [#allocation4], 2048
    $region17: #{tpu_custom_call.1} parent=1 // pred_fallthru
      _
    %314 = vsyncpa [#allocation3], 1
    %315 = vsyncpa [#allocation4], 1

</llo_original>
